<compile_context>
chip_gen: v5e
topology: v5e:2x2
jax: 0.10.0
libtpu: 0.0.40
codegen_flags: <defaults>
</compile_context>

<pallas_src>
import math

import jax
import jax.numpy as jnp
from jax.experimental import pallas as pl
from jax.experimental.pallas import tpu as pltpu


# ----------------------------- Pallas kernel ------------------------------ #
def rnn_att_kernel(
    sage_i_ref,   # (T, BP, H)  SAGE output, node set i (batch zero-padded to BP=8)
    sage_j_ref,   # (T, BP, H)  SAGE output, node set j (batch zero-padded to BP=8)
    mask_ref,     # (T, T)      causal + window attention mask (0 / -inf)
    w_ih_a_ref,   # (H, H)      w_ih[:, :H].T
    w_ih_b_ref,   # (H, H)      w_ih[:, H:].T
    w_hh_t_ref,   # (H, H)      w_hh.T
    b_rnn_ref,    # (1, H)      b_ih + b_hh
    w_qkp_ref,    # (H, 2H+1)   [q (pre-scaled) | k | v-block folded with out_proj∘fc]
    b_qkp_ref,    # (1, 2H+1)   matching bias
    b_fused_ref,  # (1, 1)      out_proj.bias @ fc.weight.T + fc.bias
    o_ref,        # (B*T, 1)    batch-major output (out_dim == 1)
):
    T, BP, H = sage_i_ref.shape
    B = o_ref.shape[0] // T
    eps2 = jnp.float32(1e-24)   # (1e-12)^2 -> same clamp as F.normalize, on the squared norm

    # --- F.normalize(p=2, dim=1) on the flat time-major layout --------------
    # (zero padded rows stay exactly zero: 0 * rsqrt(eps2) == 0)
    si = sage_i_ref[...].reshape(T * BP, H)
    sj = sage_j_ref[...].reshape(T * BP, H)
    ni = si * jax.lax.rsqrt(jnp.maximum(jnp.sum(si * si, axis=-1, keepdims=True), eps2))
    nj = sj * jax.lax.rsqrt(jnp.maximum(jnp.sum(sj * sj, axis=-1, keepdims=True), eps2))

    # --- hoisted, time-invariant RNN input projection ------------------------
    # concat(ni, nj) @ w_ih.T  ==  ni @ w_ih[:, :H].T + nj @ w_ih[:, H:].T
    # NOTE(prod): cast MXU operands to bf16 (preferred_element_type=f32) on v6e/v7x.
    x_proj = (jnp.dot(ni, w_ih_a_ref[...], preferred_element_type=jnp.float32)
              + jnp.dot(nj, w_ih_b_ref[...], preferred_element_type=jnp.float32)
              + b_rnn_ref[...])                               # (T*BP, H), time-major

    # --- ReLU RNN recurrence: whole (8, H) sublane tiles per step -----------
    # Only h @ w_hh^T sits on the serial chain; x_proj slices are tile-aligned
    # and h stays a traced value -> no VMEM scratch, no masked scatter stores.
    # TODO(synk): if T grows beyond a handful of steps, switch this static
    #             Python loop to lax.fori_loop to bound vreg live ranges.
    w_hh_t = w_hh_t_ref[...]
    h = jnp.zeros((BP, H), jnp.float32)
    hs = []
    for t in range(T):                                        # T static & small
        h = jnp.maximum(
            x_proj[t * BP:(t + 1) * BP, :]
            + jnp.dot(h, w_hh_t, preferred_element_type=jnp.float32),
            0.0)
        hs.append(h)

    # --- batch-major rearrangement at trace level (vreg sublane selects) ----
    # rows ordered b*T + t; only the B real batches are gathered (pads dropped).
    rnn_bm = jnp.concatenate(
        [hs[t][b:b + 1, :] for b in range(B) for t in range(T)], axis=0)  # (B*T, H)

    # --- fused q / k / v-projection: v block already carries out_proj∘fc ----
    qkp = (jnp.dot(rnn_bm, w_qkp_ref[...], preferred_element_type=jnp.float32)
           + b_qkp_ref[...])                                  # (B*T, 2H+1), batch-major
    mask = mask_ref[...]

    # --- single-head attention, unrolled over the tiny static batch ---------
    cols = []
    for b in range(B):
        blk = qkp[b * T:(b + 1) * T, :]                       # tile-aligned row block
        q_b = blk[:, :H]                                      # 1/sqrt(H) folded in
        k_b = blk[:, H:2 * H]
        vp_b = blk[:, 2 * H:]                                 # (T, 1): v @ (out_proj∘fc)
        # q @ k^T without materializing a transpose (NT matmul)
        s_b = jax.lax.dot_general(q_b, k_b, (((1,), (1,)), ((), ())),
                                  preferred_element_type=jnp.float32) + mask
        m = jnp.max(s_b, axis=-1, keepdims=True)
        p = jnp.exp(s_b - m)
        attn = p * pl.reciprocal(jnp.sum(p, axis=-1, keepdims=True), approx=True)
        cols.append(jnp.dot(attn, vp_b, preferred_element_type=jnp.float32))   # (T, 1)

    # single (B*T, 1) slab store; out_dim == 1 so the masked store is accepted.
    o_ref[...] = jnp.concatenate(cols, axis=0) + b_fused_ref[...]


# ------------------------- one-time parameter prep ------------------------- #
def prepare_params(params):
    """Weight plumbing hoisted out of the per-call path: transposes, 1/sqrt(H)
    q-scale folding, and the algebraic fusion of out_proj with the final
    Linear, folded into the v block of in_proj (exact at inference)."""
    H = params['w_hh'].shape[0]
    scale = jnp.float32(1.0 / math.sqrt(H))
    w_ih = params['w_ih']                                            # (H, 2H)
    in_w, in_b = params['in_w'], params['in_b']                      # (3H, H), (1, 3H)
    w_fused = params['out_w'].T @ params['fc_w'].T                   # (H, out_dim)
    b_fused = params['out_b'] @ params['fc_w'].T + params['fc_b']    # (1, out_dim)
    w_qkp = jnp.concatenate([in_w[:H].T * scale,                     # q block (pre-scaled)
                             in_w[H:2 * H].T,                        # k block
                             in_w[2 * H:].T @ w_fused], axis=1)      # v ∘ out_proj ∘ fc
    b_qkp = jnp.concatenate([in_b[:, :H] * scale,
                             in_b[:, H:2 * H],
                             in_b[:, 2 * H:] @ w_fused], axis=1)
    return dict(
        w_ih_a=w_ih[:, :H].T, w_ih_b=w_ih[:, H:].T, w_hh_t=params['w_hh'].T,
        b_rnn=params['b_ih'] + params['b_hh'],
        w_qkp=w_qkp, b_qkp=b_qkp, b_fused=b_fused)


# ------------------------------ wrapper ------------------------------------ #
def rnn_att_forward(sage_i, sage_j, mask, prepped):
    T, B, H = sage_i.shape
    BP = pl.cdiv(B, 8) * 8                   # pad batch to full 8-row sublane tiles
    pad = ((0, 0), (0, BP - B), (0, 0))
    sage_i_p = jnp.pad(sage_i, pad)
    sage_j_p = jnp.pad(sage_j, pad)

    # NOTE(prod): at production (T, B, H) give sage_i/sage_j BlockSpecs over a
    # grid on B with dimension_semantics=("parallel",) (uses both v7x TCs) and
    # set vmem_limit_bytes (v7x has only 64 MiB physical VMEM).  At this toy
    # size a single gridless program is launch-overhead bound, so stay gridless.
    vmem = pl.BlockSpec(memory_space=pltpu.MemorySpace.VMEM)
    args = (sage_i_p, sage_j_p, mask,
            prepped['w_ih_a'], prepped['w_ih_b'], prepped['w_hh_t'],
            prepped['b_rnn'], prepped['w_qkp'], prepped['b_qkp'],
            prepped['b_fused'])
    out = pl.pallas_call(
        rnn_att_kernel,
        out_shape=jax.ShapeDtypeStruct((B * T, 1), jnp.float32),
        in_specs=[vmem] * len(args),
        out_specs=vmem,
    )(*args)
    # batch-major (B*T, 1) -> (T, B), matching self.out(outs).squeeze(-1)
    return out[:, 0].reshape(B, T).T


# ------------------------ pure-JAX reference ------------------------------- #
def rnn_att_reference(sage_i, sage_j, mask, params):
    T, B, H = sage_i.shape
    eps = 1e-12
    ni = sage_i / jnp.maximum(jnp.linalg.norm(sage_i, axis=-1, keepdims=True), eps)
    nj = sage_j / jnp.maximum(jnp.linalg.norm(sage_j, axis=-1, keepdims=True), eps)
    states = jnp.concatenate([ni, nj], axis=-1)
    h = jnp.zeros((B, H), jnp.float32)
    outs = []
    for t in range(T):
        h = jax.nn.relu(states[t] @ params['w_ih'].T + params['b_ih']
                        + h @ params['w_hh'].T + params['b_hh'])
        outs.append(h)
    rnn_out = jnp.stack(outs, axis=0)
    qkv = rnn_out.reshape(T * B, H) @ params['in_w'].T + params['in_b']
    q = (qkv[:, :H] / math.sqrt(H)).reshape(T, B, H)
    k = qkv[:, H:2 * H].reshape(T, B, H)
    v = qkv[:, 2 * H:].reshape(T, B, H)
    scores = jnp.einsum('tbh,sbh->bts', q, k) + mask[None]
    attn = jax.nn.softmax(scores, axis=-1)
    ctx = jnp.einsum('bts,sbh->tbh', attn, v).reshape(T * B, H)
    proj = ctx @ params['out_w'].T + params['out_b']
    y = proj @ params['fc_w'].T + params['fc_b']
    return y.reshape(T, B)


# ------------------------------- main --------------------------------------- #
if __name__ == "__main__":
    T, B, H, OUT_DIM, ATTN_WND = 8, 2, 32, 1, 4

    key = jax.random.PRNGKey(0)
    ks = jax.random.split(key, 12)

    def unif(k, shape, s):
        return jax.random.uniform(k, shape, jnp.float32, -s, s)

    s_rnn = 1.0 / math.sqrt(H)
    s_xav = math.sqrt(6.0 / (H + 3 * H))
    params = {
        'w_ih':  unif(ks[0], (H, 2 * H), s_rnn),
        'b_ih':  unif(ks[1], (1, H), s_rnn),
        'w_hh':  unif(ks[2], (H, H), s_rnn),
        'b_hh':  unif(ks[3], (1, H), s_rnn),
        'in_w':  unif(ks[4], (3 * H, H), s_xav),
        'in_b':  jnp.zeros((1, 3 * H), jnp.float32),
        'out_w': unif(ks[5], (H, H), s_rnn),
        'out_b': jnp.zeros((1, H), jnp.float32),
        'fc_w':  unif(ks[6], (OUT_DIM, H), s_rnn),
        'fc_b':  unif(ks[7], (1, OUT_DIM), s_rnn),
    }

    # per-timestep "SAGE" outputs for the two node sets (graph conv itself is
    # not reproducible here; see TODO at top).
    sage_i = jax.random.normal(ks[8], (T, B, H), jnp.float32)
    sage_j = jax.random.normal(ks[9], (T, B, H), jnp.float32)

    # attention mask: causal (triu, diag=1) + transposed window (triu, diag=attn_wnd).T
    ii = jnp.arange(T)[:, None]
    jj = jnp.arange(T)[None, :]
    neg_inf = jnp.float32(-jnp.inf)
    causal = jnp.where(jj > ii, neg_inf, 0.0)
    window = jnp.where(ii - jj >= ATTN_WND, neg_inf, 0.0)
    mask = (causal + window).astype(jnp.float32)

    prepped = prepare_params(params)        # one-time weight prep (hoisted)
    out = rnn_att_forward(sage_i, sage_j, mask, prepped)
    out = jax.block_until_ready(out)

    ref = rnn_att_reference(sage_i, sage_j, mask, params)
    assert out.shape == (T, B)
    assert bool(jnp.all(jnp.isfinite(out)))
    assert bool(jnp.allclose(out, ref, rtol=2e-3, atol=2e-3))

    print("KERNEL_OK")
</pallas_src>

<mosaic_0001>
module attributes {stable_mosaic.version = 11 : i64} {
  func.func @rnn_att_kernel(%arg0: memref<8x8x32xf32, #tpu.memory_space<vmem>>, %arg1: memref<8x8x32xf32, #tpu.memory_space<vmem>>, %arg2: memref<8x8xf32, #tpu.memory_space<vmem>>, %arg3: memref<32x32xf32, #tpu.memory_space<vmem>>, %arg4: memref<32x32xf32, #tpu.memory_space<vmem>>, %arg5: memref<32x32xf32, #tpu.memory_space<vmem>>, %arg6: memref<1x32xf32, #tpu.memory_space<vmem>>, %arg7: memref<32x65xf32, #tpu.memory_space<vmem>>, %arg8: memref<1x65xf32, #tpu.memory_space<vmem>>, %arg9: memref<1x1xf32, #tpu.memory_space<vmem>>, %arg10: memref<16x1xf32, #tpu.memory_space<vmem>>) attributes {dimension_semantics = [], scalar_prefetch = 0 : i64, scratch_operands = 0 : i64, tpu.core_type = #tpu.core_type<tc>} {
    %c0 = arith.constant 0 : index
    %c0_0 = arith.constant 0 : index
    %c0_1 = arith.constant 0 : index
    %0 = vector.load %arg0[%c0, %c0_0, %c0_1] : memref<8x8x32xf32, #tpu.memory_space<vmem>>, vector<8x8x32xf32>
    %1 = vector.shape_cast %0 : vector<8x8x32xf32> to vector<64x32xf32>
    %c0_2 = arith.constant 0 : index
    %c0_3 = arith.constant 0 : index
    %c0_4 = arith.constant 0 : index
    %2 = vector.load %arg1[%c0_2, %c0_3, %c0_4] : memref<8x8x32xf32, #tpu.memory_space<vmem>>, vector<8x8x32xf32>
    %3 = vector.shape_cast %2 : vector<8x8x32xf32> to vector<64x32xf32>
    %4 = arith.mulf %1, %1 : vector<64x32xf32>
    %cst = arith.constant dense<0.000000e+00> : vector<64xf32>
    %5 = vector.multi_reduction <add>, %4, %cst [1] : vector<64x32xf32> to vector<64xf32>
    %6 = vector.shape_cast %5 : vector<64xf32> to vector<64x1xf32>
    %cst_5 = arith.constant 1.000000e-24 : f32
    %7 = vector.broadcast %cst_5 : f32 to vector<64x1xf32>
    %8 = arith.maximumf %6, %7 : vector<64x1xf32>
    %9 = math.rsqrt %8 : vector<64x1xf32>
    %10 = vector.broadcast %9 : vector<64x1xf32> to vector<64x32xf32>
    %11 = arith.mulf %1, %10 : vector<64x32xf32>
    %12 = arith.mulf %3, %3 : vector<64x32xf32>
    %cst_6 = arith.constant dense<0.000000e+00> : vector<64xf32>
    %13 = vector.multi_reduction <add>, %12, %cst_6 [1] : vector<64x32xf32> to vector<64xf32>
    %14 = vector.shape_cast %13 : vector<64xf32> to vector<64x1xf32>
    %cst_7 = arith.constant 1.000000e-24 : f32
    %15 = vector.broadcast %cst_7 : f32 to vector<64x1xf32>
    %16 = arith.maximumf %14, %15 : vector<64x1xf32>
    %17 = math.rsqrt %16 : vector<64x1xf32>
    %18 = vector.broadcast %17 : vector<64x1xf32> to vector<64x32xf32>
    %19 = arith.mulf %3, %18 : vector<64x32xf32>
    %c0_8 = arith.constant 0 : index
    %c0_9 = arith.constant 0 : index
    %20 = vector.load %arg3[%c0_8, %c0_9] : memref<32x32xf32, #tpu.memory_space<vmem>>, vector<32x32xf32>
    %cst_10 = arith.constant dense<0.000000e+00> : vector<64x32xf32>
    %21 = tpu.matmul %11, %20, %cst_10 {dimension_numbers = #tpu.dot_dimension_numbers<[1], [0], [0], [1], [0, 0, 1, 1], [], []>} : vector<64x32xf32>, vector<32x32xf32>, vector<64x32xf32> -> vector<64x32xf32>
    %c0_11 = arith.constant 0 : index
    %c0_12 = arith.constant 0 : index
    %22 = vector.load %arg4[%c0_11, %c0_12] : memref<32x32xf32, #tpu.memory_space<vmem>>, vector<32x32xf32>
    %cst_13 = arith.constant dense<0.000000e+00> : vector<64x32xf32>
    %23 = tpu.matmul %19, %22, %cst_13 {dimension_numbers = #tpu.dot_dimension_numbers<[1], [0], [0], [1], [0, 0, 1, 1], [], []>} : vector<64x32xf32>, vector<32x32xf32>, vector<64x32xf32> -> vector<64x32xf32>
    %24 = arith.addf %21, %23 : vector<64x32xf32>
    %c0_14 = arith.constant 0 : index
    %c0_15 = arith.constant 0 : index
    %25 = vector.load %arg6[%c0_14, %c0_15] : memref<1x32xf32, #tpu.memory_space<vmem>>, vector<1x32xf32>
    %26 = vector.broadcast %25 : vector<1x32xf32> to vector<64x32xf32>
    %27 = arith.addf %24, %26 : vector<64x32xf32>
    %c0_16 = arith.constant 0 : index
    %c0_17 = arith.constant 0 : index
    %28 = vector.load %arg5[%c0_16, %c0_17] : memref<32x32xf32, #tpu.memory_space<vmem>>, vector<32x32xf32>
    %cst_18 = arith.constant 0.000000e+00 : f32
    %29 = vector.broadcast %cst_18 : f32 to vector<8x32xf32>
    %30 = vector.extract_strided_slice %27 {offsets = [0, 0], sizes = [8, 32], strides = [1, 1]} : vector<64x32xf32> to vector<8x32xf32>
    %cst_19 = arith.constant dense<0.000000e+00> : vector<8x32xf32>
    %31 = tpu.matmul %29, %28, %cst_19 {dimension_numbers = #tpu.dot_dimension_numbers<[1], [0], [0], [1], [0, 0, 1, 1], [], []>} : vector<8x32xf32>, vector<32x32xf32>, vector<8x32xf32> -> vector<8x32xf32>
    %32 = arith.addf %30, %31 : vector<8x32xf32>
    %cst_20 = arith.constant 0.000000e+00 : f32
    %33 = vector.broadcast %cst_20 : f32 to vector<8x32xf32>
    %34 = arith.maximumf %32, %33 : vector<8x32xf32>
    %35 = vector.extract_strided_slice %27 {offsets = [8, 0], sizes = [8, 32], strides = [1, 1]} : vector<64x32xf32> to vector<8x32xf32>
    %cst_21 = arith.constant dense<0.000000e+00> : vector<8x32xf32>
    %36 = tpu.matmul %34, %28, %cst_21 {dimension_numbers = #tpu.dot_dimension_numbers<[1], [0], [0], [1], [0, 0, 1, 1], [], []>} : vector<8x32xf32>, vector<32x32xf32>, vector<8x32xf32> -> vector<8x32xf32>
    %37 = arith.addf %35, %36 : vector<8x32xf32>
    %cst_22 = arith.constant 0.000000e+00 : f32
    %38 = vector.broadcast %cst_22 : f32 to vector<8x32xf32>
    %39 = arith.maximumf %37, %38 : vector<8x32xf32>
    %40 = vector.extract_strided_slice %27 {offsets = [16, 0], sizes = [8, 32], strides = [1, 1]} : vector<64x32xf32> to vector<8x32xf32>
    %cst_23 = arith.constant dense<0.000000e+00> : vector<8x32xf32>
    %41 = tpu.matmul %39, %28, %cst_23 {dimension_numbers = #tpu.dot_dimension_numbers<[1], [0], [0], [1], [0, 0, 1, 1], [], []>} : vector<8x32xf32>, vector<32x32xf32>, vector<8x32xf32> -> vector<8x32xf32>
    %42 = arith.addf %40, %41 : vector<8x32xf32>
    %cst_24 = arith.constant 0.000000e+00 : f32
    %43 = vector.broadcast %cst_24 : f32 to vector<8x32xf32>
    %44 = arith.maximumf %42, %43 : vector<8x32xf32>
    %45 = vector.extract_strided_slice %27 {offsets = [24, 0], sizes = [8, 32], strides = [1, 1]} : vector<64x32xf32> to vector<8x32xf32>
    %cst_25 = arith.constant dense<0.000000e+00> : vector<8x32xf32>
    %46 = tpu.matmul %44, %28, %cst_25 {dimension_numbers = #tpu.dot_dimension_numbers<[1], [0], [0], [1], [0, 0, 1, 1], [], []>} : vector<8x32xf32>, vector<32x32xf32>, vector<8x32xf32> -> vector<8x32xf32>
    %47 = arith.addf %45, %46 : vector<8x32xf32>
    %cst_26 = arith.constant 0.000000e+00 : f32
    %48 = vector.broadcast %cst_26 : f32 to vector<8x32xf32>
    %49 = arith.maximumf %47, %48 : vector<8x32xf32>
    %50 = vector.extract_strided_slice %27 {offsets = [32, 0], sizes = [8, 32], strides = [1, 1]} : vector<64x32xf32> to vector<8x32xf32>
    %cst_27 = arith.constant dense<0.000000e+00> : vector<8x32xf32>
    %51 = tpu.matmul %49, %28, %cst_27 {dimension_numbers = #tpu.dot_dimension_numbers<[1], [0], [0], [1], [0, 0, 1, 1], [], []>} : vector<8x32xf32>, vector<32x32xf32>, vector<8x32xf32> -> vector<8x32xf32>
    %52 = arith.addf %50, %51 : vector<8x32xf32>
    %cst_28 = arith.constant 0.000000e+00 : f32
    %53 = vector.broadcast %cst_28 : f32 to vector<8x32xf32>
    %54 = arith.maximumf %52, %53 : vector<8x32xf32>
    %55 = vector.extract_strided_slice %27 {offsets = [40, 0], sizes = [8, 32], strides = [1, 1]} : vector<64x32xf32> to vector<8x32xf32>
    %cst_29 = arith.constant dense<0.000000e+00> : vector<8x32xf32>
    %56 = tpu.matmul %54, %28, %cst_29 {dimension_numbers = #tpu.dot_dimension_numbers<[1], [0], [0], [1], [0, 0, 1, 1], [], []>} : vector<8x32xf32>, vector<32x32xf32>, vector<8x32xf32> -> vector<8x32xf32>
    %57 = arith.addf %55, %56 : vector<8x32xf32>
    %cst_30 = arith.constant 0.000000e+00 : f32
    %58 = vector.broadcast %cst_30 : f32 to vector<8x32xf32>
    %59 = arith.maximumf %57, %58 : vector<8x32xf32>
    %60 = vector.extract_strided_slice %27 {offsets = [48, 0], sizes = [8, 32], strides = [1, 1]} : vector<64x32xf32> to vector<8x32xf32>
    %cst_31 = arith.constant dense<0.000000e+00> : vector<8x32xf32>
    %61 = tpu.matmul %59, %28, %cst_31 {dimension_numbers = #tpu.dot_dimension_numbers<[1], [0], [0], [1], [0, 0, 1, 1], [], []>} : vector<8x32xf32>, vector<32x32xf32>, vector<8x32xf32> -> vector<8x32xf32>
    %62 = arith.addf %60, %61 : vector<8x32xf32>
    %cst_32 = arith.constant 0.000000e+00 : f32
    %63 = vector.broadcast %cst_32 : f32 to vector<8x32xf32>
    %64 = arith.maximumf %62, %63 : vector<8x32xf32>
    %65 = vector.extract_strided_slice %27 {offsets = [56, 0], sizes = [8, 32], strides = [1, 1]} : vector<64x32xf32> to vector<8x32xf32>
    %cst_33 = arith.constant dense<0.000000e+00> : vector<8x32xf32>
    %66 = tpu.matmul %64, %28, %cst_33 {dimension_numbers = #tpu.dot_dimension_numbers<[1], [0], [0], [1], [0, 0, 1, 1], [], []>} : vector<8x32xf32>, vector<32x32xf32>, vector<8x32xf32> -> vector<8x32xf32>
    %67 = arith.addf %65, %66 : vector<8x32xf32>
    %cst_34 = arith.constant 0.000000e+00 : f32
    %68 = vector.broadcast %cst_34 : f32 to vector<8x32xf32>
    %69 = arith.maximumf %67, %68 : vector<8x32xf32>
    %70 = vector.extract_strided_slice %34 {offsets = [0, 0], sizes = [1, 32], strides = [1, 1]} : vector<8x32xf32> to vector<1x32xf32>
    %71 = vector.extract_strided_slice %39 {offsets = [0, 0], sizes = [1, 32], strides = [1, 1]} : vector<8x32xf32> to vector<1x32xf32>
    %72 = vector.extract_strided_slice %44 {offsets = [0, 0], sizes = [1, 32], strides = [1, 1]} : vector<8x32xf32> to vector<1x32xf32>
    %73 = vector.extract_strided_slice %49 {offsets = [0, 0], sizes = [1, 32], strides = [1, 1]} : vector<8x32xf32> to vector<1x32xf32>
    %74 = vector.extract_strided_slice %54 {offsets = [0, 0], sizes = [1, 32], strides = [1, 1]} : vector<8x32xf32> to vector<1x32xf32>
    %75 = vector.extract_strided_slice %59 {offsets = [0, 0], sizes = [1, 32], strides = [1, 1]} : vector<8x32xf32> to vector<1x32xf32>
    %76 = vector.extract_strided_slice %64 {offsets = [0, 0], sizes = [1, 32], strides = [1, 1]} : vector<8x32xf32> to vector<1x32xf32>
    %77 = vector.extract_strided_slice %69 {offsets = [0, 0], sizes = [1, 32], strides = [1, 1]} : vector<8x32xf32> to vector<1x32xf32>
    %78 = vector.extract_strided_slice %34 {offsets = [1, 0], sizes = [1, 32], strides = [1, 1]} : vector<8x32xf32> to vector<1x32xf32>
    %79 = vector.extract_strided_slice %39 {offsets = [1, 0], sizes = [1, 32], strides = [1, 1]} : vector<8x32xf32> to vector<1x32xf32>
    %80 = vector.extract_strided_slice %44 {offsets = [1, 0], sizes = [1, 32], strides = [1, 1]} : vector<8x32xf32> to vector<1x32xf32>
    %81 = vector.extract_strided_slice %49 {offsets = [1, 0], sizes = [1, 32], strides = [1, 1]} : vector<8x32xf32> to vector<1x32xf32>
    %82 = vector.extract_strided_slice %54 {offsets = [1, 0], sizes = [1, 32], strides = [1, 1]} : vector<8x32xf32> to vector<1x32xf32>
    %83 = vector.extract_strided_slice %59 {offsets = [1, 0], sizes = [1, 32], strides = [1, 1]} : vector<8x32xf32> to vector<1x32xf32>
    %84 = vector.extract_strided_slice %64 {offsets = [1, 0], sizes = [1, 32], strides = [1, 1]} : vector<8x32xf32> to vector<1x32xf32>
    %85 = vector.extract_strided_slice %69 {offsets = [1, 0], sizes = [1, 32], strides = [1, 1]} : vector<8x32xf32> to vector<1x32xf32>
    %86 = tpu.concatenate %70, %71, %72, %73, %74, %75, %76, %77, %78, %79, %80, %81, %82, %83, %84, %85 in 0 : vector<1x32xf32>, vector<1x32xf32>, vector<1x32xf32>, vector<1x32xf32>, vector<1x32xf32>, vector<1x32xf32>, vector<1x32xf32>, vector<1x32xf32>, vector<1x32xf32>, vector<1x32xf32>, vector<1x32xf32>, vector<1x32xf32>, vector<1x32xf32>, vector<1x32xf32>, vector<1x32xf32>, vector<1x32xf32> -> vector<16x32xf32>
    %c0_35 = arith.constant 0 : index
    %c0_36 = arith.constant 0 : index
    %87 = vector.load %arg7[%c0_35, %c0_36] : memref<32x65xf32, #tpu.memory_space<vmem>>, vector<32x65xf32>
    %cst_37 = arith.constant dense<0.000000e+00> : vector<16x65xf32>
    %88 = tpu.matmul %86, %87, %cst_37 {dimension_numbers = #tpu.dot_dimension_numbers<[1], [0], [0], [1], [0, 0, 1, 1], [], []>} : vector<16x32xf32>, vector<32x65xf32>, vector<16x65xf32> -> vector<16x65xf32>
    %c0_38 = arith.constant 0 : index
    %c0_39 = arith.constant 0 : index
    %89 = vector.load %arg8[%c0_38, %c0_39] : memref<1x65xf32, #tpu.memory_space<vmem>>, vector<1x65xf32>
    %90 = vector.broadcast %89 : vector<1x65xf32> to vector<16x65xf32>
    %91 = arith.addf %88, %90 : vector<16x65xf32>
    %c0_40 = arith.constant 0 : index
    %c0_41 = arith.constant 0 : index
    %92 = vector.load %arg2[%c0_40, %c0_41] : memref<8x8xf32, #tpu.memory_space<vmem>>, vector<8x8xf32>
    %93 = vector.extract_strided_slice %91 {offsets = [0, 0], sizes = [8, 65], strides = [1, 1]} : vector<16x65xf32> to vector<8x65xf32>
    %94 = vector.extract_strided_slice %93 {offsets = [0, 0], sizes = [8, 32], strides = [1, 1]} : vector<8x65xf32> to vector<8x32xf32>
    %95 = vector.extract_strided_slice %93 {offsets = [0, 32], sizes = [8, 32], strides = [1, 1]} : vector<8x65xf32> to vector<8x32xf32>
    %96 = vector.extract_strided_slice %93 {offsets = [0, 64], sizes = [8, 1], strides = [1, 1]} : vector<8x65xf32> to vector<8x1xf32>
    %cst_42 = arith.constant dense<0.000000e+00> : vector<8x8xf32>
    %97 = tpu.matmul %94, %95, %cst_42 {dimension_numbers = #tpu.dot_dimension_numbers<[1], [1], [0], [0], [0, 0, 1, 0], [], []>} : vector<8x32xf32>, vector<8x32xf32>, vector<8x8xf32> -> vector<8x8xf32>
    %98 = arith.addf %97, %92 : vector<8x8xf32>
    %cst_43 = arith.constant dense<0xFF800000> : vector<8xf32>
    %99 = vector.multi_reduction <maximumf>, %98, %cst_43 [1] : vector<8x8xf32> to vector<8xf32>
    %100 = vector.shape_cast %99 : vector<8xf32> to vector<8x1xf32>
    %101 = vector.broadcast %100 : vector<8x1xf32> to vector<8x8xf32>
    %102 = arith.subf %98, %101 : vector<8x8xf32>
    %103 = math.exp %102 : vector<8x8xf32>
    %cst_44 = arith.constant dense<0.000000e+00> : vector<8xf32>
    %104 = vector.multi_reduction <add>, %103, %cst_44 [1] : vector<8x8xf32> to vector<8xf32>
    %105 = vector.shape_cast %104 : vector<8xf32> to vector<8x1xf32>
    %106 = tpu.reciprocal %105 {approx = true} : vector<8x1xf32> -> vector<8x1xf32>
    %107 = vector.broadcast %106 : vector<8x1xf32> to vector<8x8xf32>
    %108 = arith.mulf %103, %107 : vector<8x8xf32>
    %cst_45 = arith.constant dense<0.000000e+00> : vector<8x1xf32>
    %109 = tpu.matmul %108, %96, %cst_45 {dimension_numbers = #tpu.dot_dimension_numbers<[1], [0], [0], [1], [0, 0, 1, 1], [], []>} : vector<8x8xf32>, vector<8x1xf32>, vector<8x1xf32> -> vector<8x1xf32>
    %110 = vector.extract_strided_slice %91 {offsets = [8, 0], sizes = [8, 65], strides = [1, 1]} : vector<16x65xf32> to vector<8x65xf32>
    %111 = vector.extract_strided_slice %110 {offsets = [0, 0], sizes = [8, 32], strides = [1, 1]} : vector<8x65xf32> to vector<8x32xf32>
    %112 = vector.extract_strided_slice %110 {offsets = [0, 32], sizes = [8, 32], strides = [1, 1]} : vector<8x65xf32> to vector<8x32xf32>
    %113 = vector.extract_strided_slice %110 {offsets = [0, 64], sizes = [8, 1], strides = [1, 1]} : vector<8x65xf32> to vector<8x1xf32>
    %cst_46 = arith.constant dense<0.000000e+00> : vector<8x8xf32>
    %114 = tpu.matmul %111, %112, %cst_46 {dimension_numbers = #tpu.dot_dimension_numbers<[1], [1], [0], [0], [0, 0, 1, 0], [], []>} : vector<8x32xf32>, vector<8x32xf32>, vector<8x8xf32> -> vector<8x8xf32>
    %115 = arith.addf %114, %92 : vector<8x8xf32>
    %cst_47 = arith.constant dense<0xFF800000> : vector<8xf32>
    %116 = vector.multi_reduction <maximumf>, %115, %cst_47 [1] : vector<8x8xf32> to vector<8xf32>
    %117 = vector.shape_cast %116 : vector<8xf32> to vector<8x1xf32>
    %118 = vector.broadcast %117 : vector<8x1xf32> to vector<8x8xf32>
    %119 = arith.subf %115, %118 : vector<8x8xf32>
    %120 = math.exp %119 : vector<8x8xf32>
    %cst_48 = arith.constant dense<0.000000e+00> : vector<8xf32>
    %121 = vector.multi_reduction <add>, %120, %cst_48 [1] : vector<8x8xf32> to vector<8xf32>
    %122 = vector.shape_cast %121 : vector<8xf32> to vector<8x1xf32>
    %123 = tpu.reciprocal %122 {approx = true} : vector<8x1xf32> -> vector<8x1xf32>
    %124 = vector.broadcast %123 : vector<8x1xf32> to vector<8x8xf32>
    %125 = arith.mulf %120, %124 : vector<8x8xf32>
    %cst_49 = arith.constant dense<0.000000e+00> : vector<8x1xf32>
    %126 = tpu.matmul %125, %113, %cst_49 {dimension_numbers = #tpu.dot_dimension_numbers<[1], [0], [0], [1], [0, 0, 1, 1], [], []>} : vector<8x8xf32>, vector<8x1xf32>, vector<8x1xf32> -> vector<8x1xf32>
    %127 = tpu.concatenate %109, %126 in 0 : vector<8x1xf32>, vector<8x1xf32> -> vector<16x1xf32>
    %c0_50 = arith.constant 0 : index
    %c0_51 = arith.constant 0 : index
    %128 = vector.load %arg9[%c0_50, %c0_51] : memref<1x1xf32, #tpu.memory_space<vmem>>, vector<1x1xf32>
    %129 = vector.broadcast %128 : vector<1x1xf32> to vector<16x1xf32>
    %130 = arith.addf %127, %129 : vector<16x1xf32>
    %c0_52 = arith.constant 0 : index
    %c0_53 = arith.constant 0 : index
    %131 = vector.load %arg10[%c0_52, %c0_53] : memref<16x1xf32, #tpu.memory_space<vmem>>, vector<16x1xf32>
    tpu.vector_store %arg10[%c0_52, %c0_53], %130 {strides = array<i32>} : memref<16x1xf32, #tpu.memory_space<vmem>>, vector<16x1xf32>,
    return
  }
}

</mosaic_0001>

<llo_original>
// kernel: tpu_custom_call.1
$region0: #{tpu_custom_call.1}
  #allocation0 [shape = 'u32[]', space=smem, size = 0x4, offset = 0x4, fixed_abs, tag = 'smem constant byte address 0x4 - core index']
  #allocation1 [shape = 'u32[72,128]{1,0:T(1,128)}', space=vmem, size = 0x9000, scoped, tag = 'internal scratch']
  #allocation2 [shape = 'f32[1,1]{1,0:T(1,128)S(1)}', space=vmem, size = 0x200, scoped, tag = 'scoped memory for tpu_custom_call.1']
  %s0 = inlined_call_operand.hbm [shape: f32[8,8,32], index: 0, kind: input, shape index: {}]
  %s1 = inlined_call_operand.hbm [shape: f32[8,8,32], index: 1, kind: input, shape index: {}]
  %s2 = inlined_call_operand.hbm [shape: f32[8,8], index: 2, kind: input, shape index: {}]
  %s3 = inlined_call_operand.hbm [shape: f32[32,32], index: 3, kind: input, shape index: {}]
  %s4 = inlined_call_operand.hbm [shape: f32[32,32], index: 4, kind: input, shape index: {}]
  %s5 = inlined_call_operand.hbm [shape: f32[32,32], index: 5, kind: input, shape index: {}]
  %s6 = inlined_call_operand.vmem [shape: f32[1,32], index: 6, kind: input, shape index: {}]
  %s7 = inlined_call_operand.hbm [shape: f32[32,65], index: 7, kind: input, shape index: {}]
  %s8 = inlined_call_operand.vmem [shape: f32[1,65], index: 8, kind: input, shape index: {}]
  %s9 = inlined_call_operand.<no memory space> [shape: f32[1,1], index: 9, kind: input, shape index: {}]
  %s10 = inlined_call_operand.vmem [shape: f32[16,1], index: 10, kind: output, shape index: {}]
  %s11 = sld [smem:[#allocation0]]
  $region78: #{tpu_custom_call.1} parent=0
    _
  %s13 = ssub.s32 1, %s11
  %s14 = scalar_select 0, %s13, %s11
  %v15 = vstv %s9
  %16 = vst [vmem:[#allocation2] sm:$0x1] %v15
  $region1: #{tpu_custom_call.1} parent=0
    #allocation3 [shape = 'u8[32768]{0}', space=vmem, size = 0x8000, scoped, tag = 'input window, operand 0, single buffered']
    #allocation4 [shape = 's32[1]{0}', space=sflag, size = 0x4, scoped, tag = 'scoped memory for tpu_custom_call.1']
    #allocation5 [shape = 'u8[32768]{0}', space=vmem, size = 0x8000, scoped, tag = 'input window, operand 1, single buffered']
    #allocation6 [shape = 's32[1]{0}', space=sflag, size = 0x4, scoped, tag = 'scoped memory for tpu_custom_call.1']
    #allocation7 [shape = 'u8[4096]{0}', space=vmem, size = 0x1000, scoped, tag = 'input window, operand 2, single buffered']
    #allocation8 [shape = 'u8[16384]{0}', space=vmem, size = 0x4000, scoped, tag = 'input window, operand 3, single buffered']
    #allocation9 [shape = 's32[1]{0}', space=sflag, size = 0x4, scoped, tag = 'scoped memory for tpu_custom_call.1']
    #allocation10 [shape = 'u8[16384]{0}', space=vmem, size = 0x4000, scoped, tag = 'input window, operand 4, single buffered']
    #allocation11 [shape = 'u8[16384]{0}', space=vmem, size = 0x4000, scoped, tag = 'input window, operand 5, single buffered']
    #allocation12 [shape = 's32[1]{0}', space=sflag, size = 0x4, scoped, tag = 'scoped memory for tpu_custom_call.1']
    #allocation13 [shape = 'u8[16384]{0}', space=vmem, size = 0x4000, scoped, tag = 'input window, operand 7, single buffered']
    %17 = vsyncpa [#allocation4], 0
    %18 = vsyncpa [#allocation6], 0
    %19 = vsyncpa [#allocation9], 0
    %20 = vsyncpa [#allocation12], 0
    // Predicated region
    $region2: #{tpu_custom_call.1} parent=1 // pred_check
      _
    $region3: #{tpu_custom_call.1} parent=1 // pred_check_branch
      %22 = sbr.rel (0) target = $region5
    $region4: #{tpu_custom_call.1} parent=1 // pred_region
      %24 = vsyncadd [#allocation4], 0
      %s25 = sshll.u32 %s0, 4
      %s26 = int_to_ptr.hbm [resolvable:$true] %s25
      %s27 = sshll.u32 [#allocation3], 4
      %s28 = int_to_ptr.vmem [resolvable:$true] %s27
      %33 = dma.hbm_to_vmem [thread:$0]  %s26, 1024, %s28, [#allocation4], 128, 128, 8
    $region5: #{tpu_custom_call.1} parent=1 // pred_fallthru
      _
    // Predicated region
    $region6: #{tpu_custom_call.1} parent=1 // pred_check
      _
    $region7: #{tpu_custom_call.1} parent=1 // pred_check_branch
      %35 = sbr.rel (0) target = $region9
    $region8: #{tpu_custom_call.1} parent=1 // pred_region
      %37 = vsyncadd [#allocation6], 0
      %s38 = sshll.u32 %s1, 4
      %s39 = int_to_ptr.hbm [resolvable:$true] %s38
      %s40 = sshll.u32 [#allocation5], 4
      %s41 = int_to_ptr.vmem [resolvable:$true] %s40
      %46 = dma.hbm_to_vmem [thread:$0]  %s39, 1024, %s41, [#allocation6], 128, 128, 8
    $region9: #{tpu_custom_call.1} parent=1 // pred_fallthru
      _
    // Predicated region
    $region10: #{tpu_custom_call.1} parent=1 // pred_check
      _
    $region11: #{tpu_custom_call.1} parent=1 // pred_check_branch
      %48 = sbr.rel (0) target = $region13
    $region12: #{tpu_custom_call.1} parent=1 // pred_region
      %50 = vsyncadd [#allocation6], 0
      %s52 = sshll.u32 %s2, 4
      %s53 = int_to_ptr.hbm [resolvable:$true] %s52
      %s54 = sshll.u32 [#allocation7], 4
      %s55 = int_to_ptr.vmem [resolvable:$true] %s54
      %57 = dma.hbm_to_vmem [thread:$0]  %s53, 128, %s55, [#allocation6]
    $region13: #{tpu_custom_call.1} parent=1 // pred_fallthru
      _
    // Predicated region
    $region14: #{tpu_custom_call.1} parent=1 // pred_check
      _
    $region15: #{tpu_custom_call.1} parent=1 // pred_check_branch
      %59 = sbr.rel (0) target = $region17
    $region16: #{tpu_custom_call.1} parent=1 // pred_region
      %61 = vsyncadd [#allocation9], 0
      %s62 = sshll.u32 %s3, 4
      %s63 = int_to_ptr.hbm [resolvable:$true] %s62
      %s64 = sshll.u32 [#allocation8], 4
      %s65 = int_to_ptr.vmem [resolvable:$true] %s64
      %70 = dma.hbm_to_vmem [thread:$0]  %s63, 512, %s65, [#allocation9], 128, 128, 8
    $region17: #{tpu_custom_call.1} parent=1 // pred_fallthru
      _
    // Predicated region
    $region18: #{tpu_custom_call.1} parent=1 // pred_check
      _
    $region19: #{tpu_custom_call.1} parent=1 // pred_check_branch
      %72 = sbr.rel (0) target = $region21
    $region20: #{tpu_custom_call.1} parent=1 // pred_region
      %74 = vsyncadd [#allocation9], 0
      %s75 = sshll.u32 %s4, 4
      %s76 = int_to_ptr.hbm [resolvable:$true] %s75
      %s77 = sshll.u32 [#allocation10], 4
      %s78 = int_to_ptr.vmem [resolvable:$true] %s77
      %83 = dma.hbm_to_vmem [thread:$0]  %s76, 512, %s78, [#allocation9], 128, 128, 8
    $region21: #{tpu_custom_call.1} parent=1 // pred_fallthru
      _
    // Predicated region
    $region22: #{tpu_custom_call.1} parent=1 // pred_check
      _
    $region23: #{tpu_custom_call.1} parent=1 // pred_check_branch
      %85 = sbr.rel (0) target = $region25
    $region24: #{tpu_custom_call.1} parent=1 // pred_region
      %87 = vsyncadd [#allocation12], 0
      %s88 = sshll.u32 %s5, 4
      %s89 = int_to_ptr.hbm [resolvable:$true] %s88
      %s90 = sshll.u32 [#allocation11], 4
      %s91 = int_to_ptr.vmem [resolvable:$true] %s90
      %96 = dma.hbm_to_vmem [thread:$0]  %s89, 512, %s91, [#allocation12], 128, 128, 8
    $region25: #{tpu_custom_call.1} parent=1 // pred_fallthru
      _
    // Predicated region
    $region26: #{tpu_custom_call.1} parent=1 // pred_check
      _
    $region27: #{tpu_custom_call.1} parent=1 // pred_check_branch
      %98 = sbr.rel (0) target = $region29
    $region28: #{tpu_custom_call.1} parent=1 // pred_region
      _
    $region29: #{tpu_custom_call.1} parent=1 // pred_fallthru
      _
    // Predicated region
    $region30: #{tpu_custom_call.1} parent=1 // pred_check
      _
    $region31: #{tpu_custom_call.1} parent=1 // pred_check_branch
      %100 = sbr.rel (0) target = $region33
    $region32: #{tpu_custom_call.1} parent=1 // pred_region
      %102 = vsyncadd [#allocation12], 0
      %s103 = sshll.u32 %s7, 4
      %s104 = int_to_ptr.hbm [resolvable:$true] %s103
      %s105 = sshll.u32 [#allocation13], 4
      %s106 = int_to_ptr.vmem [resolvable:$true] %s105
      %111 = dma.hbm_to_vmem [thread:$0]  %s104, 512, %s106, [#allocation12], 128, 128, 8
    $region33: #{tpu_custom_call.1} parent=1 // pred_fallthru
      _
    // Predicated region
    $region34: #{tpu_custom_call.1} parent=1 // pred_check
      _
    $region35: #{tpu_custom_call.1} parent=1 // pred_check_branch
      %113 = sbr.rel (0) target = $region37
    $region36: #{tpu_custom_call.1} parent=1 // pred_region
      _
    $region37: #{tpu_custom_call.1} parent=1 // pred_fallthru
      _
    // Predicated region
    $region38: #{tpu_custom_call.1} parent=1 // pred_check
      _
    $region39: #{tpu_custom_call.1} parent=1 // pred_check_branch
      %115 = sbr.rel (0) target = $region41
    $region40: #{tpu_custom_call.1} parent=1 // pred_region
      _
    $region41: #{tpu_custom_call.1} parent=1 // pred_fallthru
      _
    // Predicated region
    $region42: #{tpu_custom_call.1} parent=1 // pred_check
      _
    $region43: #{tpu_custom_call.1} parent=1 // pred_check_branch
      %117 = sbr.rel (0) target = $region45
    $region44: #{tpu_custom_call.1} parent=1 // pred_region
      %119 = dma.done [#allocation4], 1024
    $region45: #{tpu_custom_call.1} parent=1 // pred_fallthru
      _
    // Predicated region
    $region46: #{tpu_custom_call.1} parent=1 // pred_check
      _
    $region47: #{tpu_custom_call.1} parent=1 // pred_check_branch
      %121 = sbr.rel (0) target = $region49
    $region48: #{tpu_custom_call.1} parent=1 // pred_region
      %123 = dma.done [#allocation6], 1024
    $region49: #{tpu_custom_call.1} parent=1 // pred_fallthru
      _
    // Predicated region
    $region50: #{tpu_custom_call.1} parent=1 // pred_check
      _
    $region51: #{tpu_custom_call.1} parent=1 // pred_check_branch
      %125 = sbr.rel (0) target = $region53
    $region52: #{tpu_custom_call.1} parent=1 // pred_region
      %127 = dma.done [#allocation6], 128
    $region53: #{tpu_custom_call.1} parent=1 // pred_fallthru
      _
    // Predicated region
    $region54: #{tpu_custom_call.1} parent=1 // pred_check
      _
    $region55: #{tpu_custom_call.1} parent=1 // pred_check_branch
      %129 = sbr.rel (0) target = $region57
    $region56: #{tpu_custom_call.1} parent=1 // pred_region
      %131 = dma.done [#allocation9], 512
    $region57: #{tpu_custom_call.1} parent=1 // pred_fallthru
      _
    // Predicated region
    $region58: #{tpu_custom_call.1} parent=1 // pred_check
      _
    $region59: #{tpu_custom_call.1} parent=1 // pred_check_branch
      %133 = sbr.rel (0) target = $region61
    $region60: #{tpu_custom_call.1} parent=1 // pred_region
      %135 = dma.done [#allocation9], 512
    $region61: #{tpu_custom_call.1} parent=1 // pred_fallthru
      _
    // Predicated region
    $region62: #{tpu_custom_call.1} parent=1 // pred_check
      _
    $region63: #{tpu_custom_call.1} parent=1 // pred_check_branch
      %137 = sbr.rel (0) target = $region65
    $region64: #{tpu_custom_call.1} parent=1 // pred_region
      %139 = dma.done [#allocation12], 512
    $region65: #{tpu_custom_call.1} parent=1 // pred_fallthru
      _
    // Predicated region
    $region66: #{tpu_custom_call.1} parent=1 // pred_check
      _
    $region67: #{tpu_custom_call.1} parent=1 // pred_check_branch
      %141 = sbr.rel (0) target = $region69
    $region68: #{tpu_custom_call.1} parent=1 // pred_region
      %143 = dma.done [#allocation12], 512
    $region69: #{tpu_custom_call.1} parent=1 // pred_fallthru
      _
    %v144 = vld [vmem:[#allocation3] sm:$0xff]
    %v145 = vld [vmem:[#allocation3 + $0x8] sm:$0xff]
    %v146 = vld [vmem:[#allocation3 + $0x10] sm:$0xff]
    %v147 = vld [vmem:[#allocation3 + $0x18] sm:$0xff]
    %v148 = vld [vmem:[#allocation3 + $0x20] sm:$0xff]
    %v149 = vld [vmem:[#allocation3 + $0x28] sm:$0xff]
    %v150 = vld [vmem:[#allocation3 + $0x30] sm:$0xff]
    %v151 = vld [vmem:[#allocation3 + $0x38] sm:$0xff]
    %v152 = vld [vmem:[#allocation5] sm:$0xff]
    %v153 = vld [vmem:[#allocation5 + $0x8] sm:$0xff]
    %v154 = vld [vmem:[#allocation5 + $0x10] sm:$0xff]
    %v155 = vld [vmem:[#allocation5 + $0x18] sm:$0xff]
    %v156 = vld [vmem:[#allocation5 + $0x20] sm:$0xff]
    %v157 = vld [vmem:[#allocation5 + $0x28] sm:$0xff]
    %v158 = vld [vmem:[#allocation5 + $0x30] sm:$0xff]
    %v159 = vld [vmem:[#allocation5 + $0x38] sm:$0xff]
    %v160 = vmul.f32 %v144, %v144
    %v161 = vmul.f32 %v145, %v145
    %v162 = vmul.f32 %v146, %v146
    %v163 = vmul.f32 %v147, %v147
    %v164 = vmul.f32 %v148, %v148
    %v165 = vmul.f32 %v149, %v149
    %v166 = vmul.f32 %v150, %v150
    %v167 = vmul.f32 %v151, %v151
    %vm168 = vcmask 261120
    %v169 = vsel %vm168, %v160, 0.0
    %170 = vadd.xlane.f32.xlu0 %v169
    %v171 = vpop.xlane.xlu0 %170
    %v172 = vsel %vm168, %v161, 0.0
    %173 = vadd.xlane.f32.xlu0 %v172
    %v174 = vpop.xlane.xlu0 %173
    %v175 = vsel %vm168, %v162, 0.0
    %176 = vadd.xlane.f32.xlu0 %v175
    %v177 = vpop.xlane.xlu0 %176
    %v178 = vsel %vm168, %v163, 0.0
    %179 = vadd.xlane.f32.xlu0 %v178
    %v180 = vpop.xlane.xlu0 %179
    %v181 = vsel %vm168, %v164, 0.0
    %182 = vadd.xlane.f32.xlu0 %v181
    %v183 = vpop.xlane.xlu0 %182
    %v184 = vsel %vm168, %v165, 0.0
    %185 = vadd.xlane.f32.xlu0 %v184
    %v186 = vpop.xlane.xlu0 %185
    %v187 = vsel %vm168, %v166, 0.0
    %188 = vadd.xlane.f32.xlu0 %v187
    %v189 = vpop.xlane.xlu0 %188
    %v190 = vsel %vm168, %v167, 0.0
    %191 = vadd.xlane.f32.xlu0 %v190
    %v192 = vpop.xlane.xlu0 %191
    %v193 = vmax.f32 %v171, 1e-24
    %v194 = vmax.f32 %v174, 1e-24
    %v195 = vmax.f32 %v177, 1e-24
    %v196 = vmax.f32 %v180, 1e-24
    %v197 = vmax.f32 %v183, 1e-24
    %v198 = vmax.f32 %v186, 1e-24
    %v199 = vmax.f32 %v189, 1e-24
    %v200 = vmax.f32 %v192, 1e-24
    %v201 = vrsqrt.pop %v193
    %v202 = vmul.f32 %v201, %v193
    %v203 = vmul.f32 %v202, %v201
    %v204 = vmul.f32 0.5, %v203
    %v205 = vsub.f32 1.5, %v204
    %v206 = vmul.f32 %v201, %v205
    %vm207 = vweird.f32 %v193
    %vm208 = vweird.f32 %v201
    %vm209 = vmor %vm207, %vm208
    %v210 = vsel %vm209, %v201, %v206
    %v211 = vrsqrt.pop %v194
    %v212 = vmul.f32 %v211, %v194
    %v213 = vmul.f32 %v212, %v211
    %v214 = vmul.f32 0.5, %v213
    %v215 = vsub.f32 1.5, %v214
    %v216 = vmul.f32 %v211, %v215
    %vm217 = vweird.f32 %v194
    %vm218 = vweird.f32 %v211
    %vm219 = vmor %vm217, %vm218
    %v220 = vsel %vm219, %v211, %v216
    %v221 = vrsqrt.pop %v195
    %v222 = vmul.f32 %v221, %v195
    %v223 = vmul.f32 %v222, %v221
    %v224 = vmul.f32 0.5, %v223
    %v225 = vsub.f32 1.5, %v224
    %v226 = vmul.f32 %v221, %v225
    %vm227 = vweird.f32 %v195
    %vm228 = vweird.f32 %v221
    %vm229 = vmor %vm227, %vm228
    %v230 = vsel %vm229, %v221, %v226
    %v231 = vrsqrt.pop %v196
    %v232 = vmul.f32 %v231, %v196
    %v233 = vmul.f32 %v232, %v231
    %v234 = vmul.f32 0.5, %v233
    %v235 = vsub.f32 1.5, %v234
    %v236 = vmul.f32 %v231, %v235
    %vm237 = vweird.f32 %v196
    %vm238 = vweird.f32 %v231
    %vm239 = vmor %vm237, %vm238
    %v240 = vsel %vm239, %v231, %v236
    %v241 = vrsqrt.pop %v197
    %v242 = vmul.f32 %v241, %v197
    %v243 = vmul.f32 %v242, %v241
    %v244 = vmul.f32 0.5, %v243
    %v245 = vsub.f32 1.5, %v244
    %v246 = vmul.f32 %v241, %v245
    %vm247 = vweird.f32 %v197
    %vm248 = vweird.f32 %v241
    %vm249 = vmor %vm247, %vm248
    %v250 = vsel %vm249, %v241, %v246
    %v251 = vrsqrt.pop %v198
    %v252 = vmul.f32 %v251, %v198
    %v253 = vmul.f32 %v252, %v251
    %v254 = vmul.f32 0.5, %v253
    %v255 = vsub.f32 1.5, %v254
    %v256 = vmul.f32 %v251, %v255
    %vm257 = vweird.f32 %v198
    %vm258 = vweird.f32 %v251
    %vm259 = vmor %vm257, %vm258
    %v260 = vsel %vm259, %v251, %v256
    %v261 = vrsqrt.pop %v199
    %v262 = vmul.f32 %v261, %v199
    %v263 = vmul.f32 %v262, %v261
    %v264 = vmul.f32 0.5, %v263
    %v265 = vsub.f32 1.5, %v264
    %v266 = vmul.f32 %v261, %v265
    %vm267 = vweird.f32 %v199
    %vm268 = vweird.f32 %v261
    %vm269 = vmor %vm267, %vm268
    %v270 = vsel %vm269, %v261, %v266
    %v271 = vrsqrt.pop %v200
    %v272 = vmul.f32 %v271, %v200
    %v273 = vmul.f32 %v272, %v271
    %v274 = vmul.f32 0.5, %v273
    %v275 = vsub.f32 1.5, %v274
    %v276 = vmul.f32 %v271, %v275
    %vm277 = vweird.f32 %v200
    %vm278 = vweird.f32 %v271
    %vm279 = vmor %vm277, %vm278
    %v280 = vsel %vm279, %v271, %v276
    %v281 = vmul.f32 %v144, %v210
    %v282 = vmul.f32 %v145, %v220
    %v283 = vmul.f32 %v146, %v230
    %v284 = vmul.f32 %v147, %v240
    %v285 = vmul.f32 %v148, %v250
    %v286 = vmul.f32 %v149, %v260
    %v287 = vmul.f32 %v150, %v270
    %v288 = vmul.f32 %v151, %v280
    %v289 = vmul.f32 %v152, %v152
    %v290 = vmul.f32 %v153, %v153
    %v291 = vmul.f32 %v154, %v154
    %v292 = vmul.f32 %v155, %v155
    %v293 = vmul.f32 %v156, %v156
    %v294 = vmul.f32 %v157, %v157
    %v295 = vmul.f32 %v158, %v158
    %v296 = vmul.f32 %v159, %v159
    %v297 = vsel %vm168, %v289, 0.0
    %298 = vadd.xlane.f32.xlu0 %v297
    %v299 = vpop.xlane.xlu0 %298
    %v300 = vsel %vm168, %v290, 0.0
    %301 = vadd.xlane.f32.xlu0 %v300
    %v302 = vpop.xlane.xlu0 %301
    %v303 = vsel %vm168, %v291, 0.0
    %304 = vadd.xlane.f32.xlu0 %v303
    %v305 = vpop.xlane.xlu0 %304
    %v306 = vsel %vm168, %v292, 0.0
    %307 = vadd.xlane.f32.xlu0 %v306
    %v308 = vpop.xlane.xlu0 %307
    %v309 = vsel %vm168, %v293, 0.0
    %310 = vadd.xlane.f32.xlu0 %v309
    %v311 = vpop.xlane.xlu0 %310
    %v312 = vsel %vm168, %v294, 0.0
    %313 = vadd.xlane.f32.xlu0 %v312
    %v314 = vpop.xlane.xlu0 %313
    %v315 = vsel %vm168, %v295, 0.0
    %316 = vadd.xlane.f32.xlu0 %v315
    %v317 = vpop.xlane.xlu0 %316
    %v318 = vsel %vm168, %v296, 0.0
    %319 = vadd.xlane.f32.xlu0 %v318
    %v320 = vpop.xlane.xlu0 %319
    %v321 = vmax.f32 %v299, 1e-24
    %v322 = vmax.f32 %v302, 1e-24
    %v323 = vmax.f32 %v305, 1e-24
    %v324 = vmax.f32 %v308, 1e-24
    %v325 = vmax.f32 %v311, 1e-24
    %v326 = vmax.f32 %v314, 1e-24
    %v327 = vmax.f32 %v317, 1e-24
    %v328 = vmax.f32 %v320, 1e-24
    %v329 = vrsqrt.pop %v321
    %v330 = vmul.f32 %v329, %v321
    %v331 = vmul.f32 %v330, %v329
    %v332 = vmul.f32 0.5, %v331
    %v333 = vsub.f32 1.5, %v332
    %v334 = vmul.f32 %v329, %v333
    %vm335 = vweird.f32 %v321
    %vm336 = vweird.f32 %v329
    %vm337 = vmor %vm335, %vm336
    %v338 = vsel %vm337, %v329, %v334
    %v339 = vrsqrt.pop %v322
    %v340 = vmul.f32 %v339, %v322
    %v341 = vmul.f32 %v340, %v339
    %v342 = vmul.f32 0.5, %v341
    %v343 = vsub.f32 1.5, %v342
    %v344 = vmul.f32 %v339, %v343
    %vm345 = vweird.f32 %v322
    %vm346 = vweird.f32 %v339
    %vm347 = vmor %vm345, %vm346
    %v348 = vsel %vm347, %v339, %v344
    %v349 = vrsqrt.pop %v323
    %v350 = vmul.f32 %v349, %v323
    %v351 = vmul.f32 %v350, %v349
    %v352 = vmul.f32 0.5, %v351
    %v353 = vsub.f32 1.5, %v352
    %v354 = vmul.f32 %v349, %v353
    %vm355 = vweird.f32 %v323
    %vm356 = vweird.f32 %v349
    %vm357 = vmor %vm355, %vm356
    %v358 = vsel %vm357, %v349, %v354
    %v359 = vrsqrt.pop %v324
    %v360 = vmul.f32 %v359, %v324
    %v361 = vmul.f32 %v360, %v359
    %v362 = vmul.f32 0.5, %v361
    %v363 = vsub.f32 1.5, %v362
    %v364 = vmul.f32 %v359, %v363
    %vm365 = vweird.f32 %v324
    %vm366 = vweird.f32 %v359
    %vm367 = vmor %vm365, %vm366
    %v368 = vsel %vm367, %v359, %v364
    %v369 = vrsqrt.pop %v325
    %v370 = vmul.f32 %v369, %v325
    %v371 = vmul.f32 %v370, %v369
    %v372 = vmul.f32 0.5, %v371
    %v373 = vsub.f32 1.5, %v372
    %v374 = vmul.f32 %v369, %v373
    %vm375 = vweird.f32 %v325
    %vm376 = vweird.f32 %v369
    %vm377 = vmor %vm375, %vm376
    %v378 = vsel %vm377, %v369, %v374
    %v379 = vrsqrt.pop %v326
    %v380 = vmul.f32 %v379, %v326
    %v381 = vmul.f32 %v380, %v379
    %v382 = vmul.f32 0.5, %v381
    %v383 = vsub.f32 1.5, %v382
    %v384 = vmul.f32 %v379, %v383
    %vm385 = vweird.f32 %v326
    %vm386 = vweird.f32 %v379
    %vm387 = vmor %vm385, %vm386
    %v388 = vsel %vm387, %v379, %v384
    %v389 = vrsqrt.pop %v327
    %v390 = vmul.f32 %v389, %v327
    %v391 = vmul.f32 %v390, %v389
    %v392 = vmul.f32 0.5, %v391
    %v393 = vsub.f32 1.5, %v392
    %v394 = vmul.f32 %v389, %v393
    %vm395 = vweird.f32 %v327
    %vm396 = vweird.f32 %v389
    %vm397 = vmor %vm395, %vm396
    %v398 = vsel %vm397, %v389, %v394
    %v399 = vrsqrt.pop %v328
    %v400 = vmul.f32 %v399, %v328
    %v401 = vmul.f32 %v400, %v399
    %v402 = vmul.f32 0.5, %v401
    %v403 = vsub.f32 1.5, %v402
    %v404 = vmul.f32 %v399, %v403
    %vm405 = vweird.f32 %v328
    %vm406 = vweird.f32 %v399
    %vm407 = vmor %vm405, %vm406
    %v408 = vsel %vm407, %v399, %v404
    %v409 = vmul.f32 %v152, %v338
    %v410 = vmul.f32 %v153, %v348
    %v411 = vmul.f32 %v154, %v358
    %v412 = vmul.f32 %v155, %v368
    %v413 = vmul.f32 %v156, %v378
    %v414 = vmul.f32 %v157, %v388
    %v415 = vmul.f32 %v158, %v398
    %v416 = vmul.f32 %v159, %v408
    %v417 = vld [vmem:[#allocation8] sm:$0xff]
    %v418 = vld [vmem:[#allocation8 + $0x8] sm:$0xff]
    %v419 = vld [vmem:[#allocation8 + $0x10] sm:$0xff]
    %v420 = vld [vmem:[#allocation8 + $0x18] sm:$0xff]
    %v421 = vld [vmem:[#allocation10] sm:$0xff]
    %v422 = vld [vmem:[#allocation10 + $0x8] sm:$0xff]
    %v423 = vld [vmem:[#allocation10 + $0x10] sm:$0xff]
    %v424 = vld [vmem:[#allocation10 + $0x18] sm:$0xff]
    %v426 = vsel %vm168, %v409, 0
    %v429 = vsel %vm168, %v410, 0
    %v432 = vsel %vm168, %v411, 0
    %v435 = vsel %vm168, %v412, 0
    %v438 = vsel %vm168, %v413, 0
    %v441 = vsel %vm168, %v414, 0
    %v444 = vsel %vm168, %v415, 0
    %v447 = vsel %vm168, %v416, 0
    %449 = vmatpush.msra.mxu0 0.0
    %450 = vmatpush.msra.mxu0 0.0
    %451 = vmatpush.msra.mxu0 0.0
    %452 = vmatpush.msra.mxu0 0.0
    %453 = vmatpush.msra.mxu0 0.0
    %454 = vmatpush.msra.mxu0 0.0
    %455 = vmatpush.msra.mxu0 0.0
    %456 = vmatpush.msra.mxu0 0.0
    %457 = vmatpush.msra.mxu0 0.0
    %458 = vmatpush.msra.mxu0 0.0
    %459 = vmatpush.msra.mxu0 0.0
    %460 = vmatpush.msra.mxu0 0.0
    %461 = vmatpush.msra.mxu0 %v424
    %462 = vmatpush.msra.mxu0 %v423
    %463 = vmatpush.msra.mxu0 %v422
    %464 = vmatpush.msra.mxu0 %v421
    %465 = vmatmul.f32.gmra.mxu0 %v426
    %v466 = vpop.f32.mrf.mxu0
    %v467 = vadd.f32 0.0, %v466
    %468 = vmatmul.f32.gmra.mxu0 %v429
    %v469 = vpop.f32.mrf.mxu0
    %v470 = vadd.f32 0.0, %v469
    %471 = vmatmul.f32.gmra.mxu0 %v432
    %v472 = vpop.f32.mrf.mxu0
    %v473 = vadd.f32 0.0, %v472
    %474 = vmatmul.f32.gmra.mxu0 %v435
    %v475 = vpop.f32.mrf.mxu0
    %v476 = vadd.f32 0.0, %v475
    %477 = vmatmul.f32.gmra.mxu0 %v438
    %v478 = vpop.f32.mrf.mxu0
    %v479 = vadd.f32 0.0, %v478
    %480 = vmatmul.f32.gmra.mxu0 %v441
    %v481 = vpop.f32.mrf.mxu0
    %v482 = vadd.f32 0.0, %v481
    %483 = vmatmul.f32.gmra.mxu0 %v444
    %v484 = vpop.f32.mrf.mxu0
    %v485 = vadd.f32 0.0, %v484
    %486 = vmatmul.f32.gmra.mxu0 %v447
    %v487 = vpop.f32.mrf.mxu0
    %v488 = vadd.f32 0.0, %v487
    %489 = vdwg.mxu0
    %v491 = vsel %vm168, %v281, 0
    %v494 = vsel %vm168, %v282, 0
    %v497 = vsel %vm168, %v283, 0
    %v500 = vsel %vm168, %v284, 0
    %v503 = vsel %vm168, %v285, 0
    %v506 = vsel %vm168, %v286, 0
    %v509 = vsel %vm168, %v287, 0
    %v512 = vsel %vm168, %v288, 0
    %514 = vmatpush.msra.mxu0 0.0
    %515 = vmatpush.msra.mxu0 0.0
    %516 = vmatpush.msra.mxu0 0.0
    %517 = vmatpush.msra.mxu0 0.0
    %518 = vmatpush.msra.mxu0 0.0
    %519 = vmatpush.msra.mxu0 0.0
    %520 = vmatpush.msra.mxu0 0.0
    %521 = vmatpush.msra.mxu0 0.0
    %522 = vmatpush.msra.mxu0 0.0
    %523 = vmatpush.msra.mxu0 0.0
    %524 = vmatpush.msra.mxu0 0.0
    %525 = vmatpush.msra.mxu0 0.0
    %526 = vmatpush.msra.mxu0 %v420
    %527 = vmatpush.msra.mxu0 %v419
    %528 = vmatpush.msra.mxu0 %v418
    %529 = vmatpush.msra.mxu0 %v417
    %530 = vmatmul.f32.gmra.mxu0 %v491
    %v531 = vpop.f32.mrf.mxu0
    %v532 = vadd.f32 %v467, %v531
    %533 = vmatmul.f32.gmra.mxu0 %v494
    %v534 = vpop.f32.mrf.mxu0
    %v535 = vadd.f32 %v470, %v534
    %536 = vmatmul.f32.gmra.mxu0 %v497
    %v537 = vpop.f32.mrf.mxu0
    %v538 = vadd.f32 %v473, %v537
    %539 = vmatmul.f32.gmra.mxu0 %v500
    %v540 = vpop.f32.mrf.mxu0
    %v541 = vadd.f32 %v476, %v540
    %542 = vmatmul.f32.gmra.mxu0 %v503
    %v543 = vpop.f32.mrf.mxu0
    %v544 = vadd.f32 %v479, %v543
    %545 = vmatmul.f32.gmra.mxu0 %v506
    %v546 = vpop.f32.mrf.mxu0
    %v547 = vadd.f32 %v482, %v546
    %548 = vmatmul.f32.gmra.mxu0 %v509
    %v549 = vpop.f32.mrf.mxu0
    %v550 = vadd.f32 %v485, %v549
    %551 = vmatmul.f32.gmra.mxu0 %v512
    %v552 = vpop.f32.mrf.mxu0
    %v553 = vadd.f32 %v488, %v552
    %554 = vdwg.mxu0
    %v555 = vld [vmem:[%s6] sm:$0x1]
    %v557 = vperm.slane %v555, 0
    %v559 = vadd.f32 %v532, %v557
    %v560 = vadd.f32 %v535, %v557
    %v561 = vadd.f32 %v538, %v557
    %v562 = vadd.f32 %v541, %v557
    %v563 = vadd.f32 %v544, %v557
    %v564 = vadd.f32 %v547, %v557
    %v565 = vadd.f32 %v550, %v557
    %v566 = vadd.f32 %v553, %v557
    %v567 = vld [vmem:[#allocation11] sm:$0xff]
    %v568 = vld [vmem:[#allocation11 + $0x8] sm:$0xff]
    %v569 = vld [vmem:[#allocation11 + $0x10] sm:$0xff]
    %v570 = vld [vmem:[#allocation11 + $0x18] sm:$0xff]
    %v572 = vsel %vm168, 0.0, 0
    %574 = vmatpush.msra.mxu0 0.0
    %575 = vmatpush.msra.mxu0 0.0
    %576 = vmatpush.msra.mxu0 0.0
    %577 = vmatpush.msra.mxu0 0.0
    %578 = vmatpush.msra.mxu0 0.0
    %579 = vmatpush.msra.mxu0 0.0
    %580 = vmatpush.msra.mxu0 0.0
    %581 = vmatpush.msra.mxu0 0.0
    %582 = vmatpush.msra.mxu0 0.0
    %583 = vmatpush.msra.mxu0 0.0
    %584 = vmatpush.msra.mxu0 0.0
    %585 = vmatpush.msra.mxu0 0.0
    %586 = vmatpush.msra.mxu0 %v570
    %587 = vmatpush.msra.mxu0 %v569
    %588 = vmatpush.msra.mxu0 %v568
    %589 = vmatpush.msra.mxu0 %v567
    %590 = vmatmul.f32.gmra.mxu0 %v572
    %v591 = vpop.f32.mrf.mxu0
    %v592 = vadd.f32 0.0, %v591
    %593 = vdwg.mxu0
    %v594 = vadd.f32 %v559, %v592
    %v595 = vmax.f32 %v594, 0.0
    %v597 = vsel %vm168, %v595, 0
    %599 = vmatpush.msra.mxu0 0.0
    %600 = vmatpush.msra.mxu0 0.0
    %601 = vmatpush.msra.mxu0 0.0
    %602 = vmatpush.msra.mxu0 0.0
    %603 = vmatpush.msra.mxu0 0.0
    %604 = vmatpush.msra.mxu0 0.0
    %605 = vmatpush.msra.mxu0 0.0
    %606 = vmatpush.msra.mxu0 0.0
    %607 = vmatpush.msra.mxu0 0.0
    %608 = vmatpush.msra.mxu0 0.0
    %609 = vmatpush.msra.mxu0 0.0
    %610 = vmatpush.msra.mxu0 0.0
    %611 = vmatpush.msra.mxu0 %v570
    %612 = vmatpush.msra.mxu0 %v569
    %613 = vmatpush.msra.mxu0 %v568
    %614 = vmatpush.msra.mxu0 %v567
    %615 = vmatmul.f32.gmra.mxu0 %v597
    %v616 = vpop.f32.mrf.mxu0
    %v617 = vadd.f32 0.0, %v616
    %618 = vdwg.mxu0
    %v619 = vadd.f32 %v560, %v617
    %v620 = vmax.f32 %v619, 0.0
    %v622 = vsel %vm168, %v620, 0
    %624 = vmatpush.msra.mxu0 0.0
    %625 = vmatpush.msra.mxu0 0.0
    %626 = vmatpush.msra.mxu0 0.0
    %627 = vmatpush.msra.mxu0 0.0
    %628 = vmatpush.msra.mxu0 0.0
    %629 = vmatpush.msra.mxu0 0.0
    %630 = vmatpush.msra.mxu0 0.0
    %631 = vmatpush.msra.mxu0 0.0
    %632 = vmatpush.msra.mxu0 0.0
    %633 = vmatpush.msra.mxu0 0.0
    %634 = vmatpush.msra.mxu0 0.0
    %635 = vmatpush.msra.mxu0 0.0
    %636 = vmatpush.msra.mxu0 %v570
    %637 = vmatpush.msra.mxu0 %v569
    %638 = vmatpush.msra.mxu0 %v568
    %639 = vmatpush.msra.mxu0 %v567
    %640 = vmatmul.f32.gmra.mxu0 %v622
    %v641 = vpop.f32.mrf.mxu0
    %v642 = vadd.f32 0.0, %v641
    %643 = vdwg.mxu0
    %v644 = vadd.f32 %v561, %v642
    %v645 = vmax.f32 %v644, 0.0
    %v647 = vsel %vm168, %v645, 0
    %649 = vmatpush.msra.mxu0 0.0
    %650 = vmatpush.msra.mxu0 0.0
    %651 = vmatpush.msra.mxu0 0.0
    %652 = vmatpush.msra.mxu0 0.0
    %653 = vmatpush.msra.mxu0 0.0
    %654 = vmatpush.msra.mxu0 0.0
    %655 = vmatpush.msra.mxu0 0.0
    %656 = vmatpush.msra.mxu0 0.0
    %657 = vmatpush.msra.mxu0 0.0
    %658 = vmatpush.msra.mxu0 0.0
    %659 = vmatpush.msra.mxu0 0.0
    %660 = vmatpush.msra.mxu0 0.0
    %661 = vmatpush.msra.mxu0 %v570
    %662 = vmatpush.msra.mxu0 %v569
    %663 = vmatpush.msra.mxu0 %v568
    %664 = vmatpush.msra.mxu0 %v567
    %665 = vmatmul.f32.gmra.mxu0 %v647
    %v666 = vpop.f32.mrf.mxu0
    %v667 = vadd.f32 0.0, %v666
    %668 = vdwg.mxu0
    %v669 = vadd.f32 %v562, %v667
    %v670 = vmax.f32 %v669, 0.0
    %v672 = vsel %vm168, %v670, 0
    %674 = vmatpush.msra.mxu0 0.0
    %675 = vmatpush.msra.mxu0 0.0
    %676 = vmatpush.msra.mxu0 0.0
    %677 = vmatpush.msra.mxu0 0.0
    %678 = vmatpush.msra.mxu0 0.0
    %679 = vmatpush.msra.mxu0 0.0
    %680 = vmatpush.msra.mxu0 0.0
    %681 = vmatpush.msra.mxu0 0.0
    %682 = vmatpush.msra.mxu0 0.0
    %683 = vmatpush.msra.mxu0 0.0
    %684 = vmatpush.msra.mxu0 0.0
    %685 = vmatpush.msra.mxu0 0.0
    %686 = vmatpush.msra.mxu0 %v570
    %687 = vmatpush.msra.mxu0 %v569
    %688 = vmatpush.msra.mxu0 %v568
    %689 = vmatpush.msra.mxu0 %v567
    %690 = vmatmul.f32.gmra.mxu0 %v672
    %v691 = vpop.f32.mrf.mxu0
    %v692 = vadd.f32 0.0, %v691
    %693 = vdwg.mxu0
    %v694 = vadd.f32 %v563, %v692
    %v695 = vmax.f32 %v694, 0.0
    %v697 = vsel %vm168, %v695, 0
    %699 = vmatpush.msra.mxu0 0.0
    %700 = vmatpush.msra.mxu0 0.0
    %701 = vmatpush.msra.mxu0 0.0
    %702 = vmatpush.msra.mxu0 0.0
    %703 = vmatpush.msra.mxu0 0.0
    %704 = vmatpush.msra.mxu0 0.0
    %705 = vmatpush.msra.mxu0 0.0
    %706 = vmatpush.msra.mxu0 0.0
    %707 = vmatpush.msra.mxu0 0.0
    %708 = vmatpush.msra.mxu0 0.0
    %709 = vmatpush.msra.mxu0 0.0
    %710 = vmatpush.msra.mxu0 0.0
    %711 = vmatpush.msra.mxu0 %v570
    %712 = vmatpush.msra.mxu0 %v569
    %713 = vmatpush.msra.mxu0 %v568
    %714 = vmatpush.msra.mxu0 %v567
    %715 = vmatmul.f32.gmra.mxu0 %v697
    %v716 = vpop.f32.mrf.mxu0
    %v717 = vadd.f32 0.0, %v716
    %718 = vdwg.mxu0
    %v719 = vadd.f32 %v564, %v717
    %v720 = vmax.f32 %v719, 0.0
    %v722 = vsel %vm168, %v720, 0
    %724 = vmatpush.msra.mxu0 0.0
    %725 = vmatpush.msra.mxu0 0.0
    %726 = vmatpush.msra.mxu0 0.0
    %727 = vmatpush.msra.mxu0 0.0
    %728 = vmatpush.msra.mxu0 0.0
    %729 = vmatpush.msra.mxu0 0.0
    %730 = vmatpush.msra.mxu0 0.0
    %731 = vmatpush.msra.mxu0 0.0
    %732 = vmatpush.msra.mxu0 0.0
    %733 = vmatpush.msra.mxu0 0.0
    %734 = vmatpush.msra.mxu0 0.0
    %735 = vmatpush.msra.mxu0 0.0
    %736 = vmatpush.msra.mxu0 %v570
    %737 = vmatpush.msra.mxu0 %v569
    %738 = vmatpush.msra.mxu0 %v568
    %739 = vmatpush.msra.mxu0 %v567
    %740 = vmatmul.f32.gmra.mxu0 %v722
    %v741 = vpop.f32.mrf.mxu0
    %v742 = vadd.f32 0.0, %v741
    %743 = vdwg.mxu0
    %v744 = vadd.f32 %v565, %v742
    %v745 = vmax.f32 %v744, 0.0
    %v747 = vsel %vm168, %v745, 0
    %749 = vmatpush.msra.mxu0 0.0
    %750 = vmatpush.msra.mxu0 0.0
    %751 = vmatpush.msra.mxu0 0.0
    %752 = vmatpush.msra.mxu0 0.0
    %753 = vmatpush.msra.mxu0 0.0
    %754 = vmatpush.msra.mxu0 0.0
    %755 = vmatpush.msra.mxu0 0.0
    %756 = vmatpush.msra.mxu0 0.0
    %757 = vmatpush.msra.mxu0 0.0
    %758 = vmatpush.msra.mxu0 0.0
    %759 = vmatpush.msra.mxu0 0.0
    %760 = vmatpush.msra.mxu0 0.0
    %761 = vmatpush.msra.mxu0 %v570
    %762 = vmatpush.msra.mxu0 %v569
    %763 = vmatpush.msra.mxu0 %v568
    %764 = vmatpush.msra.mxu0 %v567
    %765 = vmatmul.f32.gmra.mxu0 %v747
    %v766 = vpop.f32.mrf.mxu0
    %v767 = vadd.f32 0.0, %v766
    %768 = vdwg.mxu0
    %v769 = vadd.f32 %v566, %v767
    %v770 = vmax.f32 %v769, 0.0
    %v771 = vrot.slane %v620, 7
    %v773 = vrot.slane %v645, 6
    %v775 = vrot.slane %v670, 5
    %v777 = vrot.slane %v695, 4
    %v779 = vrot.slane %v720, 3
    %v781 = vrot.slane %v745, 2
    %v784 = vrot.slane %v770, 1
    %v786 = vrot.slane %v595, 1
    %v788 = vrot.slane %v645, 7
    %v790 = vrot.slane %v670, 6
    %v792 = vrot.slane %v695, 5
    %v794 = vrot.slane %v720, 4
    %v796 = vrot.slane %v745, 3
    %v798 = vrot.slane %v770, 2
    %vm800 = vcmask 1040384
    %v801 = vsel %vm800, %v595, %v771
    %vm802 = vcmask 1041408
    %v803 = vsel %vm802, %v801, %v773
    %vm804 = vcmask 1042432
    %v805 = vsel %vm804, %v803, %v775
    %vm806 = vcmask 1043456
    %v807 = vsel %vm806, %v805, %v777
    %vm808 = vcmask 1044480
    %v809 = vsel %vm808, %v807, %v779
    %vm810 = vcmask 1045504
    %v811 = vsel %vm810, %v809, %v781
    %vm812 = vcmask 1046528
    %v813 = vsel %vm812, %v811, %v784
    %v814 = vsel %vm800, %v786, %v620
    %v815 = vsel %vm802, %v814, %v788
    %v816 = vsel %vm804, %v815, %v790
    %v817 = vsel %vm806, %v816, %v792
    %v818 = vsel %vm808, %v817, %v794
    %v819 = vsel %vm810, %v818, %v796
    %v820 = vsel %vm812, %v819, %v798
    %v821 = vld [vmem:[#allocation13] sm:$0xff]
    %v822 = vld [vmem:[#allocation13 + $0x8] sm:$0xff]
    %v823 = vld [vmem:[#allocation13 + $0x10] sm:$0xff]
    %v824 = vld [vmem:[#allocation13 + $0x18] sm:$0xff]
    %v825 = vld [vmem:[%s8] sm:$0x1]
    %v827 = vperm.slane %v825, 0
    %v830 = vsel %vm168, %v813, 0
    %v833 = vsel %vm168, %v820, 0
    %835 = vmatpush.msra.mxu0 0.0
    %836 = vmatpush.msra.mxu0 0.0
    %837 = vmatpush.msra.mxu0 0.0
    %838 = vmatpush.msra.mxu0 0.0
    %839 = vmatpush.msra.mxu0 0.0
    %840 = vmatpush.msra.mxu0 0.0
    %841 = vmatpush.msra.mxu0 0.0
    %842 = vmatpush.msra.mxu0 0.0
    %843 = vmatpush.msra.mxu0 0.0
    %844 = vmatpush.msra.mxu0 0.0
    %845 = vmatpush.msra.mxu0 0.0
    %846 = vmatpush.msra.mxu0 0.0
    %847 = vmatpush.msra.mxu0 %v824
    %848 = vmatpush.msra.mxu0 %v823
    %849 = vmatpush.msra.mxu0 %v822
    %850 = vmatpush.msra.mxu0 %v821
    %851 = vmatmul.f32.gmra.mxu0 %v830
    %v852 = vpop.f32.mrf.mxu0
    %v853 = vadd.f32 %v827, %v852
    %854 = vmatmul.f32.gmra.mxu0 %v833
    %v855 = vpop.f32.mrf.mxu0
    %v856 = vadd.f32 %v827, %v855
    %857 = vdwg.mxu0
    %v858 = vld [vmem:[#allocation7] sm:$0xff]
    %860 = vrot.lane.b32.xlu0 %v853, 96
    %v861 = vpop.permute.xlu0 %860
    %v862 = vsel %vm168, %v853, 0
    %v864 = vsel %vm168, %v861, 0
    %866 = vmatpush.xpose.msra.mxu0 0.0
    %867 = vmatpush.xpose.msra.mxu0 0.0
    %868 = vmatpush.xpose.msra.mxu0 0.0
    %869 = vmatpush.xpose.msra.mxu0 0.0
    %870 = vmatpush.xpose.msra.mxu0 0.0
    %871 = vmatpush.xpose.msra.mxu0 0.0
    %872 = vmatpush.xpose.msra.mxu0 0.0
    %873 = vmatpush.xpose.msra.mxu0 0.0
    %874 = vmatpush.xpose.msra.mxu0 0.0
    %875 = vmatpush.xpose.msra.mxu0 0.0
    %876 = vmatpush.xpose.msra.mxu0 0.0
    %877 = vmatpush.xpose.msra.mxu0 0.0
    %878 = vmatpush.xpose.msra.mxu0 0.0
    %879 = vmatpush.xpose.msra.mxu0 0.0
    %880 = vmatpush.xpose.msra.mxu0 0.0
    %881 = vmatpush.xpose.msra.mxu0 %v864
    %882 = vmatmul.f32.gmra.mxu0 %v862
    %v883 = vpop.f32.mrf.mxu0
    %v884 = vadd.f32 %v858, %v883
    %885 = vdwg.mxu0
    %vm886 = vcmask 64512
    %v887 = vsel %vm886, %v884, -inf
    %888 = vmax.xlane.f32.xlu0 %v887
    %v889 = vpop.xlane.xlu0 %888
    %v890 = vsub.f32 %v884, %v889
    %v891 = vmul.f32 %v890, 1.442695
    %v892 = vpow.pop %v891
    %v893 = vsel %vm886, %v892, 0.0
    %894 = vadd.xlane.f32.xlu0 %v893
    %v895 = vpop.xlane.xlu0 %894
    %v896 = vrcp.pop %v895
    %v897 = vmul.f32 %v892, %v896
    %898 = vrot.lane.b32.xlu0 %v853, 64
    %v899 = vpop.permute.xlu0 %898
    %v902 = vsel %vm886, %v897, 0
    %904 = vmatpush.msra.mxu0 0.0
    %905 = vmatpush.msra.mxu0 0.0
    %906 = vmatpush.msra.mxu0 0.0
    %907 = vmatpush.msra.mxu0 0.0
    %908 = vmatpush.msra.mxu0 0.0
    %909 = vmatpush.msra.mxu0 0.0
    %910 = vmatpush.msra.mxu0 0.0
    %911 = vmatpush.msra.mxu0 0.0
    %912 = vmatpush.msra.mxu0 0.0
    %913 = vmatpush.msra.mxu0 0.0
    %914 = vmatpush.msra.mxu0 0.0
    %915 = vmatpush.msra.mxu0 0.0
    %916 = vmatpush.msra.mxu0 0.0
    %917 = vmatpush.msra.mxu0 0.0
    %918 = vmatpush.msra.mxu0 0.0
    %919 = vmatpush.msra.mxu0 %v899
    %920 = vmatmul.f32.gmra.mxu0 %v902
    %v921 = vpop.f32.mrf.mxu0
    %v922 = vadd.f32 0.0, %v921
    %923 = vdwg.mxu0
    %925 = vrot.lane.b32.xlu0 %v856, 96
    %v926 = vpop.permute.xlu0 %925
    %v927 = vsel %vm168, %v856, 0
    %v929 = vsel %vm168, %v926, 0
    %931 = vmatpush.xpose.msra.mxu0 0.0
    %932 = vmatpush.xpose.msra.mxu0 0.0
    %933 = vmatpush.xpose.msra.mxu0 0.0
    %934 = vmatpush.xpose.msra.mxu0 0.0
    %935 = vmatpush.xpose.msra.mxu0 0.0
    %936 = vmatpush.xpose.msra.mxu0 0.0
    %937 = vmatpush.xpose.msra.mxu0 0.0
    %938 = vmatpush.xpose.msra.mxu0 0.0
    %939 = vmatpush.xpose.msra.mxu0 0.0
    %940 = vmatpush.xpose.msra.mxu0 0.0
    %941 = vmatpush.xpose.msra.mxu0 0.0
    %942 = vmatpush.xpose.msra.mxu0 0.0
    %943 = vmatpush.xpose.msra.mxu0 0.0
    %944 = vmatpush.xpose.msra.mxu0 0.0
    %945 = vmatpush.xpose.msra.mxu0 0.0
    %946 = vmatpush.xpose.msra.mxu0 %v929
    %947 = vmatmul.f32.gmra.mxu0 %v927
    %v948 = vpop.f32.mrf.mxu0
    %v949 = vadd.f32 %v858, %v948
    %950 = vdwg.mxu0
    %v951 = vsel %vm886, %v949, -inf
    %952 = vmax.xlane.f32.xlu0 %v951
    %v953 = vpop.xlane.xlu0 %952
    %v954 = vsub.f32 %v949, %v953
    %v955 = vmul.f32 %v954, 1.442695
    %v956 = vpow.pop %v955
    %v957 = vsel %vm886, %v956, 0.0
    %958 = vadd.xlane.f32.xlu0 %v957
    %v959 = vpop.xlane.xlu0 %958
    %v960 = vrcp.pop %v959
    %v961 = vmul.f32 %v956, %v960
    %962 = vrot.lane.b32.xlu0 %v856, 64
    %v963 = vpop.permute.xlu0 %962
    %v966 = vsel %vm886, %v961, 0
    %968 = vmatpush.msra.mxu0 0.0
    %969 = vmatpush.msra.mxu0 0.0
    %970 = vmatpush.msra.mxu0 0.0
    %971 = vmatpush.msra.mxu0 0.0
    %972 = vmatpush.msra.mxu0 0.0
    %973 = vmatpush.msra.mxu0 0.0
    %974 = vmatpush.msra.mxu0 0.0
    %975 = vmatpush.msra.mxu0 0.0
    %976 = vmatpush.msra.mxu0 0.0
    %977 = vmatpush.msra.mxu0 0.0
    %978 = vmatpush.msra.mxu0 0.0
    %979 = vmatpush.msra.mxu0 0.0
    %980 = vmatpush.msra.mxu0 0.0
    %981 = vmatpush.msra.mxu0 0.0
    %982 = vmatpush.msra.mxu0 0.0
    %983 = vmatpush.msra.mxu0 %v963
    %984 = vmatmul.f32.gmra.mxu0 %v966
    %v985 = vpop.f32.mrf.mxu0
    %v986 = vadd.f32 0.0, %v985
    %987 = vdwg.mxu0
    %v988 = vld [vmem:[#allocation2] sm:$0x1]
    %v990 = vperm.slane %v988, 0
    %v992 = vadd.f32 %v922, %v990
    %v993 = vadd.f32 %v986, %v990
    %vm994 = vcmask 7168
    %995 = vst.msk [vmem:[%s10] sm:$0xff] %vm994, %v992
    %996 = vst.msk [vmem:[%s10 + $0x8] sm:$0xff] %vm994, %v993
    // Predicated region
    $region70: #{tpu_custom_call.1} parent=1 // pred_check
      _
    $region71: #{tpu_custom_call.1} parent=1 // pred_check_branch
      %998 = sbr.rel (0) target = $region73
    $region72: #{tpu_custom_call.1} parent=1 // pred_region
      _
    $region73: #{tpu_custom_call.1} parent=1 // pred_fallthru
      _
    // Predicated region
    $region74: #{tpu_custom_call.1} parent=1 // pred_check
      _
    $region75: #{tpu_custom_call.1} parent=1 // pred_check_branch
      %1000 = sbr.rel (0) target = $region77
    $region76: #{tpu_custom_call.1} parent=1 // pred_region
      _
    $region77: #{tpu_custom_call.1} parent=1 // pred_fallthru
      _
    %1001 = vsyncpa [#allocation4], 1
    %1002 = vsyncpa [#allocation6], 1
    %1003 = vsyncpa [#allocation9], 1
    %1004 = vsyncpa [#allocation12], 1

</llo_original>
